<compile_context>
chip_gen: v7x
topology: tpu7x:2x2x1
jax: 0.10.0
libtpu: 0.0.40
codegen_flags: <defaults>
</compile_context>

<pallas_src>
import jax
import jax.numpy as jnp
from jax import lax
from jax.experimental import pallas as pl
from jax.experimental.pallas import tpu as pltpu

EPS = 1e-12                           # LayerNorm.variance_epsilon default
_VMEM_TABLE_BYTES = 8 * 1024 * 1024   # threshold for the VMEM-resident-table path
_VMEM_TABLE_MAX_V = 1024              # keep the one-hot matmul cheap


def _round_up(x, m):
    return ((x + m - 1) // m) * m


def _layer_norm_f32(x, gamma, beta, E, E_pad):
    """LayerNorm over the first E lanes of x (f32, shape (R, E_pad))."""
    inv_e = 1.0 / float(E)
    u = jnp.sum(x, axis=-1, keepdims=True) * inv_e
    if E_pad != E:
        # Pad lanes are zero, so sum(x)/sum(x*x) only see real lanes; the one-pass
        # variance avoids an iota+select mask over the whole tile.
        s = jnp.maximum(jnp.sum(x * x, axis=-1, keepdims=True) * inv_e - u * u, 0.0)
    else:
        d = x - u
        s = jnp.sum(d * d, axis=-1, keepdims=True) * inv_e
    y = (x - u) * lax.rsqrt(s + EPS)
    return gamma * y + beta


# --------------------------------------------------------------------------
# Path A: small table, VMEM-resident, gather via one-hot MXU matmul.
# --------------------------------------------------------------------------
def _make_vmem_table_kernel(T, V, E, E_pad):
    def kernel(idv_ref, tab_ref, gamma_ref, beta_ref, out_ref):
        ids = idv_ref[...]                                          # (T, 1) int32
        onehot = (ids == lax.broadcasted_iota(jnp.int32, (T, V), 1)
                  ).astype(jnp.float32)                             # (T, V)
        tab = tab_ref[...].astype(jnp.float32)                      # (V, E_pad)
        x = jnp.dot(onehot, tab, preferred_element_type=jnp.float32)
        y = _layer_norm_f32(x, gamma_ref[...], beta_ref[...], E, E_pad)
        out_ref[...] = y.astype(out_ref.dtype)

    return kernel


# --------------------------------------------------------------------------
# Path B: large table in HBM, per-row DMA gather, chunk-pipelined, one wait
#         per chunk.
# --------------------------------------------------------------------------
def _make_hbm_gather_kernel(T, C, V, E, E_pad):
    chunk = T // C

    def kernel(ids_ref, emb_hbm, gamma_ref, beta_ref, out_ref, rows, sems):
        base = pl.program_id(0) * T

        def issue_chunk(j):                        # j: static python int
            off = j * chunk
            sem = sems.at[j % 2]

            def issue(t, carry):
                tok = ids_ref[base + off + t]      # SMEM scalar read
                pltpu.make_async_copy(
                    emb_hbm.at[pl.ds(tok, 1), :],
                    rows.at[pl.ds(off + t, 1), :],
                    sem,
                ).start()
                return carry

            lax.fori_loop(0, chunk, issue, 0, unroll=min(8, chunk))

        def wait_chunk(j):
            # Single wait retires the whole chunk: only the destination
            # byte-count and the semaphore matter for .wait(), and all `chunk`
            # row copies above were issued on sems[j % 2].
            dst = rows.at[pl.ds(j * chunk, chunk), :]
            src = emb_hbm.at[pl.ds(0, chunk), :] if chunk <= V else dst  # dummy
            pltpu.make_async_copy(src, dst, sems.at[j % 2]).wait()

        gamma = gamma_ref[...]                     # hoisted (no per-chunk reload)
        beta = beta_ref[...]

        issue_chunk(0)
        for j in range(C):                         # static, unrolled chunk loop
            if j + 1 < C:
                issue_chunk(j + 1)                 # SMEM id reads before the wait
            wait_chunk(j)
            x = rows[pl.ds(j * chunk, chunk), :].astype(jnp.float32)
            y = _layer_norm_f32(x, gamma, beta, E, E_pad)
            out_ref[pl.ds(j * chunk, chunk), :] = y.astype(out_ref.dtype)

    return kernel


# --------------------------------------------------------------------------
# Wrapper
# --------------------------------------------------------------------------
def embeddings_forward(ids, emb_table, gamma, beta, *, force_hbm_gather=False):
    """ids: (B, S) int; emb_table: (V, E); gamma/beta: (E,).  Returns (B, S, E) f32.

    Equivalent to Embeddings.forward in eval mode (dropout = identity).
    """
    B, S = ids.shape
    V, E = emb_table.shape
    N = B * S

    E_pad = _round_up(E, 128)                       # lane-dense output width

    # Tokens per grid step: multiple of 16, sized so 2x out block + rows scratch
    # stay around <= 12 MiB of VMEM; amortizes per-grid-step overhead.
    T = min(1024, _round_up(N, 16), max(16, ((1 << 20) // E_pad) // 16 * 16))
    num_tiles = pl.cdiv(N, T)
    N_pad = num_tiles * T

    ids_flat = jnp.clip(ids.reshape(-1).astype(jnp.int32), 0, V - 1)
    ids_flat = jnp.pad(ids_flat, (0, N_pad - N))

    # Only pad the table when E is not lane-aligned (rare).  The common 768/1024
    # case passes the table to the kernel untouched -> no per-call HBM copy.
    table = emb_table if E_pad == E else jnp.pad(emb_table, ((0, 0), (0, E_pad - E)))
    gamma2 = jnp.pad(gamma.astype(jnp.float32), (0, E_pad - E)).reshape(1, E_pad)
    beta2 = jnp.pad(beta.astype(jnp.float32), (0, E_pad - E)).reshape(1, E_pad)

    tab_bytes = V * E_pad * table.dtype.itemsize
    out_blk_bytes = T * E_pad * 4
    use_vmem_table = ((not force_hbm_gather)
                      and V <= _VMEM_TABLE_MAX_V
                      and tab_bytes <= _VMEM_TABLE_BYTES)

    cost = pl.CostEstimate(
        flops=8 * N * E,
        transcendentals=N,
        bytes_accessed=N * E_pad * table.dtype.itemsize + N * E_pad * 4 + N * 4,
    )

    if use_vmem_table:
        # VMEM-resident table; gather = one-hot MXU matmul (no DMA descriptors).
        ids_col = ids_flat.reshape(N_pad, 1)
        need = (2 * tab_bytes + 2 * out_blk_bytes + 2 * T * 4
                + T * V * 4 + T * E_pad * 4 + (4 << 20))
        out = pl.pallas_call(
            _make_vmem_table_kernel(T, V, E, E_pad),
            out_shape=jax.ShapeDtypeStruct((N_pad, E_pad), jnp.float32),
            grid_spec=pltpu.PrefetchScalarGridSpec(
                num_scalar_prefetch=0,
                grid=(num_tiles,),
                in_specs=[
                    pl.BlockSpec((T, 1), lambda i: (i, 0)),         # token ids
                    pl.BlockSpec((V, E_pad), lambda i: (0, 0)),     # table (resident)
                    pl.BlockSpec((1, E_pad), lambda i: (0, 0)),     # gamma
                    pl.BlockSpec((1, E_pad), lambda i: (0, 0)),     # beta
                ],
                out_specs=pl.BlockSpec((T, E_pad), lambda i: (i, 0)),
            ),
            compiler_params=pltpu.CompilerParams(
                dimension_semantics=("parallel",),
                vmem_limit_bytes=int(min(max(need, 33 << 20), 60 << 20))),
            cost_estimate=cost,
        )(ids_col, table, gamma2, beta2)
    else:
        # Table stays in HBM; per-row DMA gather issued per sub-chunk on one
        # semaphore, retired with a single wait per chunk, pipelined against the
        # LayerNorm of the previous chunk.
        C = 4 if T >= 64 else (2 if T >= 16 else 1)
        need = 2 * out_blk_bytes + T * E_pad * table.dtype.itemsize + (4 << 20)
        out = pl.pallas_call(
            _make_hbm_gather_kernel(T, C, V, E, E_pad),
            out_shape=jax.ShapeDtypeStruct((N_pad, E_pad), jnp.float32),
            grid_spec=pltpu.PrefetchScalarGridSpec(
                num_scalar_prefetch=1,                              # ids -> SMEM
                grid=(num_tiles,),
                in_specs=[
                    pl.BlockSpec(memory_space=pl.ANY),              # table in HBM
                    pl.BlockSpec((1, E_pad), lambda i, ids: (0, 0)),  # gamma
                    pl.BlockSpec((1, E_pad), lambda i, ids: (0, 0)),  # beta
                ],
                out_specs=pl.BlockSpec((T, E_pad), lambda i, ids: (i, 0)),
                scratch_shapes=[
                    pltpu.VMEM((T, E_pad), table.dtype),            # gathered rows
                    pltpu.SemaphoreType.DMA((2,)),
                ],
            ),
            compiler_params=pltpu.CompilerParams(
                dimension_semantics=("parallel",),
                vmem_limit_bytes=int(min(max(need, 33 << 20), 60 << 20))),
            cost_estimate=cost,
        )(ids_flat, table, gamma2, beta2)

    return out[:N, :E].reshape(B, S, E)


def embeddings_reference(ids, emb_table, gamma, beta):
    """Pure-JAX reference mirroring the PyTorch forward (eval mode)."""
    tok = emb_table[ids]                                    # (B, S, E)
    u = jnp.mean(tok, axis=-1, keepdims=True)
    s = jnp.mean((tok - u) ** 2, axis=-1, keepdims=True)
    x = (tok - u) / jnp.sqrt(s + EPS)
    return gamma * x + beta                                 # dropout = identity


if __name__ == "__main__":
    # Small shapes consistent with the module.
    VOCAB, EMB = 16, 32
    B, S = 2, 8

    key = jax.random.PRNGKey(0)
    k_tab, k_ids = jax.random.split(key)

    # nn.Embedding ~ N(0,1); padding_idx=0 row zeroed.  LayerNorm gamma=1, beta=0.
    emb_table = jax.random.normal(k_tab, (VOCAB, EMB), dtype=jnp.float32)
    emb_table = emb_table.at[0].set(0.0)
    gamma = jnp.ones((EMB,), dtype=jnp.float32)
    beta = jnp.zeros((EMB,), dtype=jnp.float32)

    ids = jax.random.randint(k_ids, (B, S), minval=0, maxval=VOCAB, dtype=jnp.int32)

    ref = embeddings_reference(ids, emb_table, gamma, beta)

    # Path A: small-table VMEM-resident (one-hot MXU gather).
    out_vmem = jax.block_until_ready(embeddings_forward(ids, emb_table, gamma, beta))
    assert out_vmem.shape == (B, S, EMB)
    assert jnp.allclose(out_vmem, ref, atol=1e-5, rtol=1e-5), "VMEM path mismatch"

    # Path B: HBM DMA-gather with chunk pipelining, forced on the same inputs.
    out_hbm = jax.block_until_ready(
        embeddings_forward(ids, emb_table, gamma, beta, force_hbm_gather=True))
    assert jnp.allclose(out_hbm, ref, atol=1e-5, rtol=1e-5), "HBM path mismatch"

    print("KERNEL_OK")
</pallas_src>

<mosaic_0001>
module attributes {stable_mosaic.version = 11 : i64} {
  func.func @kernel(%arg0: i32, %arg1: memref<16x1xi32, #tpu.memory_space<vmem>>, %arg2: memref<16x128xf32, #tpu.memory_space<vmem>>, %arg3: memref<1x128xf32, #tpu.memory_space<vmem>>, %arg4: memref<1x128xf32, #tpu.memory_space<vmem>>, %arg5: memref<16x128xf32, #tpu.memory_space<vmem>>) attributes {dimension_semantics = [#tpu.dimension_semantics<parallel>], iteration_bounds = array<i64: 1>, scalar_prefetch = 0 : i64, scratch_operands = 0 : i64, tpu.core_type = #tpu.core_type<tc>, window_params = [{transform_indices = @transform_0, window_bounds = array<i64: 16, 1>}, {pipeline_mode = #tpu.pipeline_mode<synchronous>, transform_indices = @transform_1, window_bounds = array<i64: 16, 128>}, {pipeline_mode = #tpu.pipeline_mode<synchronous>, transform_indices = @transform_2, window_bounds = array<i64: 1, 128>}, {pipeline_mode = #tpu.pipeline_mode<synchronous>, transform_indices = @transform_3, window_bounds = array<i64: 1, 128>}, {transform_indices = @transform_4, window_bounds = array<i64: 16, 128>}]} {
    %c0 = arith.constant 0 : index
    %c0_0 = arith.constant 0 : index
    %0 = vector.load %arg1[%c0, %c0_0] : memref<16x1xi32, #tpu.memory_space<vmem>>, vector<16x1xi32>
    %1 = tpu.iota {dimensions = array<i32: 1>} : vector<16x16xi32>
    %2 = vector.broadcast %0 : vector<16x1xi32> to vector<16x16xi32>
    %3 = arith.cmpi eq, %2, %1 : vector<16x16xi32>
    %4 = arith.extui %3 : vector<16x16xi1> to vector<16x16xi32>
    %5 = arith.sitofp %4 : vector<16x16xi32> to vector<16x16xf32>
    %c0_1 = arith.constant 0 : index
    %c0_2 = arith.constant 0 : index
    %6 = vector.load %arg2[%c0_1, %c0_2] : memref<16x128xf32, #tpu.memory_space<vmem>>, vector<16x128xf32>
    %cst = arith.constant dense<0.000000e+00> : vector<16x128xf32>
    %7 = tpu.matmul %5, %6, %cst {dimension_numbers = #tpu.dot_dimension_numbers<[1], [0], [0], [1], [0, 0, 1, 1], [], []>} : vector<16x16xf32>, vector<16x128xf32>, vector<16x128xf32> -> vector<16x128xf32>
    %c0_3 = arith.constant 0 : index
    %c0_4 = arith.constant 0 : index
    %8 = vector.load %arg3[%c0_3, %c0_4] : memref<1x128xf32, #tpu.memory_space<vmem>>, vector<1x128xf32>
    %c0_5 = arith.constant 0 : index
    %c0_6 = arith.constant 0 : index
    %9 = vector.load %arg4[%c0_5, %c0_6] : memref<1x128xf32, #tpu.memory_space<vmem>>, vector<1x128xf32>
    %cst_7 = arith.constant dense<0.000000e+00> : vector<16xf32>
    %10 = vector.multi_reduction <add>, %7, %cst_7 [1] : vector<16x128xf32> to vector<16xf32>
    %11 = vector.shape_cast %10 : vector<16xf32> to vector<16x1xf32>
    %cst_8 = arith.constant 3.125000e-02 : f32
    %12 = vector.broadcast %cst_8 : f32 to vector<16x1xf32>
    %13 = arith.mulf %11, %12 : vector<16x1xf32>
    %14 = arith.mulf %7, %7 : vector<16x128xf32>
    %cst_9 = arith.constant dense<0.000000e+00> : vector<16xf32>
    %15 = vector.multi_reduction <add>, %14, %cst_9 [1] : vector<16x128xf32> to vector<16xf32>
    %16 = vector.shape_cast %15 : vector<16xf32> to vector<16x1xf32>
    %cst_10 = arith.constant 3.125000e-02 : f32
    %17 = vector.broadcast %cst_10 : f32 to vector<16x1xf32>
    %18 = arith.mulf %16, %17 : vector<16x1xf32>
    %19 = arith.mulf %13, %13 : vector<16x1xf32>
    %20 = arith.subf %18, %19 : vector<16x1xf32>
    %cst_11 = arith.constant 0.000000e+00 : f32
    %21 = vector.broadcast %cst_11 : f32 to vector<16x1xf32>
    %22 = arith.maximumf %20, %21 : vector<16x1xf32>
    %23 = vector.broadcast %13 : vector<16x1xf32> to vector<16x128xf32>
    %24 = arith.subf %7, %23 : vector<16x128xf32>
    %cst_12 = arith.constant 9.99999996E-13 : f32
    %25 = vector.broadcast %cst_12 : f32 to vector<16x1xf32>
    %26 = arith.addf %22, %25 : vector<16x1xf32>
    %27 = math.rsqrt %26 : vector<16x1xf32>
    %28 = vector.broadcast %27 : vector<16x1xf32> to vector<16x128xf32>
    %29 = arith.mulf %24, %28 : vector<16x128xf32>
    %30 = vector.broadcast %8 : vector<1x128xf32> to vector<16x128xf32>
    %31 = arith.mulf %30, %29 : vector<16x128xf32>
    %32 = vector.broadcast %9 : vector<1x128xf32> to vector<16x128xf32>
    %33 = arith.addf %31, %32 : vector<16x128xf32>
    %c0_13 = arith.constant 0 : index
    %c0_14 = arith.constant 0 : index
    %34 = vector.load %arg5[%c0_13, %c0_14] : memref<16x128xf32, #tpu.memory_space<vmem>>, vector<16x128xf32>
    tpu.vector_store %arg5[%c0_13, %c0_14], %33 {strides = array<i32>} : memref<16x128xf32, #tpu.memory_space<vmem>>, vector<16x128xf32>,
    return
  }
  func.func @transform_0(%arg0: i32) -> (i32, i32) {
    %c0_i32 = arith.constant 0 : i32
    %c0_i32_0 = arith.constant 0 : i32
    return %arg0, %c0_i32 : i32, i32
  }
  func.func @transform_1(%arg0: i32) -> (i32, i32) {
    %c0_i32 = arith.constant 0 : i32
    %c0_i32_0 = arith.constant 0 : i32
    %c0_i32_1 = arith.constant 0 : i32
    return %c0_i32, %c0_i32_0 : i32, i32
  }
  func.func @transform_2(%arg0: i32) -> (i32, i32) {
    %c0_i32 = arith.constant 0 : i32
    %c0_i32_0 = arith.constant 0 : i32
    %c0_i32_1 = arith.constant 0 : i32
    return %c0_i32, %c0_i32_0 : i32, i32
  }
  func.func @transform_3(%arg0: i32) -> (i32, i32) {
    %c0_i32 = arith.constant 0 : i32
    %c0_i32_0 = arith.constant 0 : i32
    %c0_i32_1 = arith.constant 0 : i32
    return %c0_i32, %c0_i32_0 : i32, i32
  }
  func.func @transform_4(%arg0: i32) -> (i32, i32) {
    %c0_i32 = arith.constant 0 : i32
    %c0_i32_0 = arith.constant 0 : i32
    return %arg0, %c0_i32 : i32, i32
  }
}

</mosaic_0001>

<llo_original>
// kernel: tpu_custom_call.1
$region0: #{tpu_custom_call.1}
  #allocation0 [shape = 'u32[]', space=smem, size = 0x4, offset = 0x4, fixed_abs, tag = 'smem constant byte address 0x4 - core index']
  #allocation1 [shape = 'u32[144,128]{1,0:T(1,128)}', space=vmem, size = 0x12000, scoped, tag = 'internal scratch']
  %s0 = inlined_call_operand.vmem [shape: s32[16,1], index: 0, kind: input, shape index: {}]
  %s1 = inlined_call_operand.vmem [shape: f32[16,128], index: 1, kind: input, shape index: {}]
  %s2 = inlined_call_operand.vmem [shape: f32[1,128], index: 2, kind: input, shape index: {}]
  %s3 = inlined_call_operand.vmem [shape: f32[1,128], index: 3, kind: input, shape index: {}]
  %s4 = inlined_call_operand.hbm [shape: f32[16,128], index: 4, kind: output, shape index: {}]
  %s5 = sld [smem:[#allocation0]]
  $region26: #{tpu_custom_call.1} parent=0
    _
  %s7 = ssub.s32 1, %s5
  %s8 = scalar_select 0, %s7, %s5
  $region1: #{tpu_custom_call.1} parent=0
    #allocation2 [shape = 'u8[8192]{0}', space=vmem, size = 0x2000, scoped, tag = 'output window, operand 0, single buffered']
    #allocation3 [shape = 's32[1]{0}', space=sflag, size = 0x4, scoped, tag = 'scoped memory for tpu_custom_call.1']
    %9 = vsyncpa [#allocation3], 0
    // Predicated region
    $region2: #{tpu_custom_call.1} parent=1 // pred_check
      _
    $region3: #{tpu_custom_call.1} parent=1 // pred_check_branch
      %11 = sbr.rel (0) target = $region5
    $region4: #{tpu_custom_call.1} parent=1 // pred_region
      _
    $region5: #{tpu_custom_call.1} parent=1 // pred_fallthru
      _
    // Predicated region
    $region6: #{tpu_custom_call.1} parent=1 // pred_check
      _
    $region7: #{tpu_custom_call.1} parent=1 // pred_check_branch
      %13 = sbr.rel (0) target = $region9
    $region8: #{tpu_custom_call.1} parent=1 // pred_region
      _
    $region9: #{tpu_custom_call.1} parent=1 // pred_fallthru
      _
    // Predicated region
    $region10: #{tpu_custom_call.1} parent=1 // pred_check
      _
    $region11: #{tpu_custom_call.1} parent=1 // pred_check_branch
      %15 = sbr.rel (0) target = $region13
    $region12: #{tpu_custom_call.1} parent=1 // pred_region
      _
    $region13: #{tpu_custom_call.1} parent=1 // pred_fallthru
      _
    // Predicated region
    $region14: #{tpu_custom_call.1} parent=1 // pred_check
      _
    $region15: #{tpu_custom_call.1} parent=1 // pred_check_branch
      %17 = sbr.rel (0) target = $region17
    $region16: #{tpu_custom_call.1} parent=1 // pred_region
      _
    $region17: #{tpu_custom_call.1} parent=1 // pred_fallthru
      _
    %v18 = vld [vmem:[%s0] sm:$0xff]
    %v19 = vld [vmem:[%s0 + $0x8] sm:$0xff]
    %v20 = vlaneseq
    %v21 = vand.u32 %v20, 127
    %22 = vset.pattern.permute.xlu0 0
    %23 = vperm.xlu0 %22, %v18
    %v24 = vpop.permute.xlu0 %23
    %25 = vset.pattern.permute.xlu0 0
    %26 = vperm.xlu0 %25, %v19
    %v27 = vpop.permute.xlu0 %26
    %vm28 = vcmp.eq.s32.totalorder %v24, %v21
    %vm29 = vcmp.eq.s32.totalorder %v27, %v21
    %v30 = vsel %vm28, 1, 0
    %v31 = vsel %vm29, 1, 0
    %v32 = vcvt.s32.f32 %v30
    %v33 = vcvt.s32.f32 %v31
    %v34 = vld [vmem:[%s1] sm:$0xff]
    %v35 = vld [vmem:[%s1 + $0x8] sm:$0xff]
    %vm36 = vcmask 130048
    %v38 = vsel %vm36, %v32, 0
    %v41 = vsel %vm36, %v33, 0
    %43 = vmatprep.subr.mxu0 0.0
    %44 = vmatpush1.msra.mxu0 %v34
    %45 = vmatprep.subr.mxu0 0.0
    %46 = vmatpush1.msra.mxu0 %v35
    %47 = vmatprep.subr.mxu0 0.0
    %48 = vmatpush1.msra.mxu0 0.0
    %49 = vmatprep.subr.mxu0 0.0
    %50 = vmatpush1.msra.mxu0 0.0
    %51 = vmatprep.subr.mxu0 0.0
    %52 = vmatpush1.msra.mxu0 0.0
    %53 = vmatprep.subr.mxu0 0.0
    %54 = vmatpush1.msra.mxu0 0.0
    %55 = vmatprep.subr.mxu0 0.0
    %56 = vmatpush1.msra.mxu0 0.0
    %57 = vmatprep.subr.mxu0 0.0
    %58 = vmatpush1.msra.mxu0 0.0
    %59 = vmatprep.subr.mxu0 0.0
    %60 = vmatpush1.msra.mxu0 0.0
    %61 = vmatprep.subr.mxu0 0.0
    %62 = vmatpush1.msra.mxu0 0.0
    %63 = vmatprep.subr.mxu0 0.0
    %64 = vmatpush1.msra.mxu0 0.0
    %65 = vmatprep.subr.mxu0 0.0
    %66 = vmatpush1.msra.mxu0 0.0
    %67 = vmatprep.subr.mxu0 0.0
    %68 = vmatpush1.msra.mxu0 0.0
    %69 = vmatprep.subr.mxu0 0.0
    %70 = vmatpush1.msra.mxu0 0.0
    %71 = vmatprep.subr.mxu0 0.0
    %72 = vmatpush1.msra.mxu0 0.0
    %73 = vmatprep.subr.mxu0 0.0
    %74 = vmatpush1.msra.mxu0 0.0
    %75 = vmatprep.subr.mxu0 0.0
    %76 = vmatpush1.msra.mxu0 0.0
    %77 = vmatprep.subr.mxu0 0.0
    %78 = vmatpush1.msra.mxu0 0.0
    %79 = vmatprep.subr.mxu0 0.0
    %80 = vmatpush1.msra.mxu0 0.0
    %81 = vmatprep.subr.mxu0 0.0
    %82 = vmatpush1.msra.mxu0 0.0
    %83 = vmatprep.subr.mxu0 0.0
    %84 = vmatpush1.msra.mxu0 0.0
    %85 = vmatprep.subr.mxu0 0.0
    %86 = vmatpush1.msra.mxu0 0.0
    %87 = vmatprep.subr.mxu0 0.0
    %88 = vmatpush1.msra.mxu0 0.0
    %89 = vmatprep.subr.mxu0 0.0
    %90 = vmatpush1.msra.mxu0 0.0
    %91 = vmatprep.subr.mxu0 0.0
    %92 = vmatpush1.msra.mxu0 0.0
    %93 = vmatprep.subr.mxu0 0.0
    %94 = vmatpush1.msra.mxu0 0.0
    %95 = vmatprep.subr.mxu0 0.0
    %96 = vmatpush1.msra.mxu0 0.0
    %97 = vmatprep.subr.mxu0 0.0
    %98 = vmatpush1.msra.mxu0 0.0
    %99 = vmatprep.subr.mxu0 0.0
    %100 = vmatpush1.msra.mxu0 0.0
    %101 = vmatprep.subr.mxu0 0.0
    %102 = vmatpush1.msra.mxu0 0.0
    %103 = vmatprep.subr.mxu0 0.0
    %104 = vmatpush1.msra.mxu0 0.0
    %105 = vmatprep.subr.mxu0 0.0
    %106 = vmatpush1.msra.mxu0 0.0
    %107 = vmatprep.mubr.f32.mxu0 0.0
    %108 = vmatmul.mubr.f32.gmra.mrb[0].mxu0 %v38
    %v109 = vpop.f32.mrb[0].mxu0
    %v110 = vadd.f32 0.0, %v109
    %v111 = vpop.f32.mrb[0].mxu0
    %112 = vmatprep.mubr.f32.mxu0 0.0
    %113 = vmatmul.mubr.f32.gmra.mrb[0].mxu0 %v41
    %v114 = vpop.f32.mrb[0].mxu0
    %v115 = vadd.f32 0.0, %v114
    %v116 = vpop.f32.mrb[0].mxu0
    %117 = vdwg.mxu0
    %v118 = vld [vmem:[%s2] sm:$0x1]
    %v119 = vld [vmem:[%s3] sm:$0x1]
    %120 = vadd.xlane.f32.xlu0 %v110
    %v121 = vpop.xlane.xlu0 %120
    %122 = vadd.xlane.f32.xlu0 %v115
    %v123 = vpop.xlane.xlu0 %122
    %v124 = vmul.f32 %v121, 0.03125
    %v125 = vmul.f32 %v123, 0.03125
    %v126 = vmul.f32 %v110, %v110
    %v127 = vmul.f32 %v115, %v115
    %128 = vadd.xlane.f32.xlu0 %v126
    %v129 = vpop.xlane.xlu0 %128
    %130 = vadd.xlane.f32.xlu0 %v127
    %v131 = vpop.xlane.xlu0 %130
    %v132 = vmul.f32 %v129, 0.03125
    %v133 = vmul.f32 %v131, 0.03125
    %v134 = vmul.f32 %v124, %v124
    %v135 = vmul.f32 %v125, %v125
    %v136 = vsub.f32 %v132, %v134
    %v137 = vsub.f32 %v133, %v135
    %v138 = vmax.f32 %v136, 0.0
    %v139 = vmax.f32 %v137, 0.0
    %v140 = vsub.f32 %v110, %v124
    %v141 = vsub.f32 %v115, %v125
    %v142 = vadd.f32 %v138, 1e-12
    %v143 = vadd.f32 %v139, 1e-12
    %v144 = vrsqrt.pop %v142
    %v145 = vrsqrt.pop %v143
    %v146 = vmul.f32 %v140, %v144
    %v147 = vmul.f32 %v141, %v145
    %v149 = vlaneseq
    %v150 = vshrl.u32 %v149, 7
    %v151 = vsub.s32 0, %v150
    %v152 = vrot.slane %v118, %v151
    %v154 = vmul.f32 %v152, %v146
    %v155 = vmul.f32 %v152, %v147
    %v157 = vlaneseq
    %v158 = vshrl.u32 %v157, 7
    %v159 = vsub.s32 0, %v158
    %v160 = vrot.slane %v119, %v159
    %v162 = vadd.f32 %v154, %v160
    %v163 = vadd.f32 %v155, %v160
    %164 = vst [vmem:[#allocation2] sm:$0xff] %v162
    %165 = vst [vmem:[#allocation2 + $0x8] sm:$0xff] %v163
    // Predicated region
    $region18: #{tpu_custom_call.1} parent=1 // pred_check
      _
    $region19: #{tpu_custom_call.1} parent=1 // pred_check_branch
      %167 = sbr.rel (0) target = $region21
    $region20: #{tpu_custom_call.1} parent=1 // pred_region
      %s169 = ssub.s32 256, 256
      %170 = vsyncadd [#allocation3], %s169
      %s171 = sshll.u32 [#allocation2], 4
      %s172 = int_to_ptr.vmem [resolvable:$true] %s171
      %177 = dma.vmem_to_hbm [thread:$0]  %s172, 256, %s4, [#allocation3], 128, 128, 8
    $region21: #{tpu_custom_call.1} parent=1 // pred_fallthru
      _
    // Predicated region
    $region22: #{tpu_custom_call.1} parent=1 // pred_check
      _
    $region23: #{tpu_custom_call.1} parent=1 // pred_check_branch
      %179 = sbr.rel (0) target = $region25
    $region24: #{tpu_custom_call.1} parent=1 // pred_region
      %180 = dma.done [#allocation3], 256
    $region25: #{tpu_custom_call.1} parent=1 // pred_fallthru
      _
    %181 = vsyncpa [#allocation3], 1

</llo_original>
